<compile_context>
chip_gen: v6e
topology: v6e:2x2x1
jax: 0.10.0
libtpu: 0.0.40
codegen_flags: <defaults>
</compile_context>

<pallas_src>
import functools

import jax
import jax.numpy as jnp
import numpy as np
from jax.experimental import pallas as pl
from jax.experimental.pallas import tpu as pltpu

CHUNK = 256  # P-axis tile: matches 256x256 MXU on v6e/v7x, 2x128 passes on v5e.


def _lovasz_kernel(gts_ref, tri_ref, derr_ref, tgts_ref, out_ref, carry_cs_ref):
    p = pl.program_id(0)

    @pl.when(p == 0)
    def _init():
        carry_cs_ref[...] = jnp.zeros_like(carry_cs_ref)
        out_ref[...] = jnp.zeros_like(out_ref)

    tgts = tgts_ref[...]                      # (C, CHUNK) bf16, exact 0/1, sorted
    derr = derr_ref[...]                      # (C, CHUNK) f32, e[j] - e[j+1]
    C, chunk = derr.shape

    # Within-chunk inclusive prefix sum of targets via one small bf16 MXU
    # matmul against a resident upper-triangular ones matrix, carried across
    # chunks -> global cumsum(t).  f32 accumulation keeps it exact.
    cs_local = jnp.dot(tgts, tri_ref[...], preferred_element_type=jnp.float32)
    cs_t = carry_cs_ref[...] + cs_local       # (C, chunk)

    # cumsum(1 - t)[i] == (i + 1) - cumsum(t)[i]   (closed form, no 2nd matmul)
    col = jax.lax.broadcasted_iota(jnp.int32, (C, chunk), 1)
    pos = (p * chunk + col + 1).astype(jnp.float32)

    gts = gts_ref[...]                        # (C, 1), sort-order independent
    intersection = gts - cs_t
    union = gts + (pos - cs_t)                # >= i+1 >= 1, never zero
    jaccard = 1.0 - intersection / union      # (C, chunk)

    # Abel-summed Lovasz loss:
    #   sum_j e[j] * (jac[j] - jac[j-1])  ==  sum_j (e[j] - e[j+1]) * jac[j]
    # (with e[P] := 0), so no first-difference of jaccard is needed at all.
    out_ref[...] += jnp.sum(derr * jaccard, axis=-1, keepdims=True)

    # Carry the running cumsum(t) into the next chunk.
    carry_cs_ref[...] = cs_t[:, chunk - 1:chunk]


def _lovasz_pallas(gts, tri, derr, tgts):
    C, P_pad = derr.shape
    n_chunks = P_pad // CHUNK
    return pl.pallas_call(
        _lovasz_kernel,
        out_shape=jax.ShapeDtypeStruct((C, 1), jnp.float32),
        grid_spec=pltpu.PrefetchScalarGridSpec(
            num_scalar_prefetch=0,
            grid=(n_chunks,),
            in_specs=[
                pl.BlockSpec((C, 1), lambda p: (0, 0)),           # gts (resident)
                pl.BlockSpec((CHUNK, CHUNK), lambda p: (0, 0)),   # tri (resident)
                pl.BlockSpec((C, CHUNK), lambda p: (0, p)),       # derr chunk
                pl.BlockSpec((C, CHUNK), lambda p: (0, p)),       # targets chunk
            ],
            out_specs=pl.BlockSpec((C, 1), lambda p: (0, 0)),
            scratch_shapes=[
                pltpu.VMEM((C, 1), jnp.float32),   # carry: cumsum(t) so far
            ],
        ),
        compiler_params=pltpu.CompilerParams(
            # carried prefix sum across P chunks -> sequential axis
            dimension_semantics=("arbitrary",)),
    )(gts, tri, derr, tgts)


@functools.partial(jax.jit, static_argnames=("reduction",))
def lovasz_softmax(probs, targets, reduction="mean"):
    """Forward pass of LovaszSoftmax (PyTorch reference semantics).

    probs:   (N, C, H, W) or (N, C, D, H, W) softmax probabilities.
    targets: (N, H, W) or (N, D, H, W) integer class labels.
    """
    C = probs.shape[1]
    # prob_flatten: channels-last -> (P, C); kernel wants lane-dense (C, P).
    probs_cp = jnp.moveaxis(probs, 1, -1).reshape(-1, C).T.astype(jnp.float32)
    tgt_flat = targets.reshape(-1)
    P = probs_cp.shape[1]

    classes = jnp.arange(C, dtype=tgt_flat.dtype)
    tgt_onehot = (tgt_flat[None, :] == classes[:, None]).astype(jnp.float32)  # (C, P)
    errors = jnp.abs(tgt_onehot - probs_cp)                    # (C, P)

    # Per-class positive count: sort-order independent, computed once here.
    gts = jnp.sum(tgt_onehot, axis=1, keepdims=True)           # (C, 1)

    # TODO(synk): descending sort has no Pallas TPU primitive; single
    # key-value sort in plain JAX (no argsort + gathers).
    neg_err_sorted, tgt_sorted = jax.lax.sort(
        (-errors, tgt_onehot), dimension=1, num_keys=1)
    errs_sorted = -neg_err_sorted                              # (C, P) f32 desc

    # First difference of the sorted errors (e[P] := 0).  Via Abel summation
    # this replaces the in-kernel Lovasz-grad first-difference matmul.
    derr = errs_sorted - jnp.concatenate(
        [errs_sorted[:, 1:], jnp.zeros((C, 1), errs_sorted.dtype)], axis=1)

    tgts_sorted = tgt_sorted.astype(jnp.bfloat16)              # exact 0/1

    # Pad P to a multiple of CHUNK; derr==0 on pads -> zero contribution.
    P_pad = ((P + CHUNK - 1) // CHUNK) * CHUNK
    if P_pad != P:
        pad = ((0, 0), (0, P_pad - P))
        derr = jnp.pad(derr, pad)
        tgts_sorted = jnp.pad(tgts_sorted, pad)

    # Upper-triangular ones (inclusive prefix-sum matrix), resident in VMEM.
    tri = jnp.asarray(np.triu(np.ones((CHUNK, CHUNK), np.float32)),
                      dtype=jnp.bfloat16)

    losses = _lovasz_pallas(gts, tri, derr, tgts_sorted)[:, 0]  # (C,)

    if reduction == "none":
        return losses
    if reduction == "sum":
        return jnp.sum(losses)
    return jnp.mean(losses)


def _reference_lovasz(probs_nchw, targets_nhw):
    """Pure-JAX reference mirroring the PyTorch module (reduction='mean')."""
    N, C, H, W = probs_nchw.shape
    probs_flat = jnp.transpose(probs_nchw, (0, 2, 3, 1)).reshape(-1, C)
    tgt_flat = targets_nhw.reshape(-1)
    losses = []
    for c in range(C):
        tc = (tgt_flat == c).astype(jnp.float32)
        ic = probs_flat[:, c].astype(jnp.float32)
        errs = jnp.abs(tc - ic)
        order = jnp.argsort(-errs)
        errs_s = errs[order]
        tc_s = tc[order]
        gts = tc_s.sum()
        inter = gts - jnp.cumsum(tc_s)
        union = gts + jnp.cumsum(1.0 - tc_s)
        jac = 1.0 - inter / union
        jac = jac.at[1:].set(jac[1:] - jac[:-1])
        losses.append(jnp.dot(errs_s, jac))
    return jnp.mean(jnp.stack(losses))


if __name__ == "__main__":
    key = jax.random.PRNGKey(0)
    k_logits, k_tgt = jax.random.split(key)

    N, C, H, W = 2, 4, 16, 16
    logits = jax.random.normal(k_logits, (N, C, H, W), dtype=jnp.float32)
    probs = jax.nn.softmax(logits, axis=1)               # softmax probabilities, NCHW
    targets = jax.random.randint(k_tgt, (N, H, W), 0, C, dtype=jnp.int32)

    loss = lovasz_softmax(probs, targets, reduction="mean")
    loss = jax.block_until_ready(loss)

    ref = jax.block_until_ready(_reference_lovasz(probs, targets))
    np.testing.assert_allclose(np.asarray(loss), np.asarray(ref), rtol=1e-5, atol=1e-5)

    print("KERNEL_OK")
</pallas_src>

<mosaic_0001>
module attributes {stable_mosaic.version = 11 : i64} {
  func.func @_lovasz_kernel(%arg0: i32, %arg1: memref<4x1xf32, #tpu.memory_space<vmem>>, %arg2: memref<256x256xbf16, #tpu.memory_space<vmem>>, %arg3: memref<4x256xf32, #tpu.memory_space<vmem>>, %arg4: memref<4x256xbf16, #tpu.memory_space<vmem>>, %arg5: memref<4x1xf32, #tpu.memory_space<vmem>>, %arg6: memref<4x1xf32, #tpu.memory_space<vmem>>) attributes {dimension_semantics = [#tpu.dimension_semantics<arbitrary>], iteration_bounds = array<i64: 2>, scalar_prefetch = 0 : i64, scratch_operands = 1 : i64, tpu.core_type = #tpu.core_type<tc>, window_params = [{pipeline_mode = #tpu.pipeline_mode<synchronous>, transform_indices = @transform_0, window_bounds = array<i64: 4, 1>}, {pipeline_mode = #tpu.pipeline_mode<synchronous>, transform_indices = @transform_1, window_bounds = array<i64: 256, 256>}, {transform_indices = @transform_2, window_bounds = array<i64: 4, 256>}, {transform_indices = @transform_3, window_bounds = array<i64: 4, 256>}, {pipeline_mode = #tpu.pipeline_mode<synchronous>, transform_indices = @transform_4, window_bounds = array<i64: 4, 1>}]} {
    %c0_i32 = arith.constant 0 : i32
    %0 = arith.cmpi eq, %arg0, %c0_i32 : i32
    %1 = arith.extui %0 : i1 to i32
    %c0_i32_0 = arith.constant 0 : i32
    %2 = arith.cmpi ne, %1, %c0_i32_0 : i32
    scf.if %2 {
      %cst_18 = arith.constant 0.000000e+00 : f32
      %34 = vector.broadcast %cst_18 : f32 to vector<4x1xf32>
      %c0_19 = arith.constant 0 : index
      %c0_20 = arith.constant 0 : index
      %35 = vector.load %arg6[%c0_19, %c0_20] : memref<4x1xf32, #tpu.memory_space<vmem>>, vector<4x1xf32>
      tpu.vector_store %arg6[%c0_19, %c0_20], %34 {strides = array<i32>} : memref<4x1xf32, #tpu.memory_space<vmem>>, vector<4x1xf32>,
      %cst_21 = arith.constant 0.000000e+00 : f32
      %36 = vector.broadcast %cst_21 : f32 to vector<4x1xf32>
      %c0_22 = arith.constant 0 : index
      %c0_23 = arith.constant 0 : index
      %37 = vector.load %arg5[%c0_22, %c0_23] : memref<4x1xf32, #tpu.memory_space<vmem>>, vector<4x1xf32>
      tpu.vector_store %arg5[%c0_22, %c0_23], %36 {strides = array<i32>} : memref<4x1xf32, #tpu.memory_space<vmem>>, vector<4x1xf32>,
    } else {
    }
    %c0 = arith.constant 0 : index
    %c0_1 = arith.constant 0 : index
    %3 = vector.load %arg4[%c0, %c0_1] : memref<4x256xbf16, #tpu.memory_space<vmem>>, vector<4x256xbf16>
    %c0_2 = arith.constant 0 : index
    %c0_3 = arith.constant 0 : index
    %4 = vector.load %arg3[%c0_2, %c0_3] : memref<4x256xf32, #tpu.memory_space<vmem>>, vector<4x256xf32>
    %c0_4 = arith.constant 0 : index
    %c0_5 = arith.constant 0 : index
    %5 = vector.load %arg2[%c0_4, %c0_5] : memref<256x256xbf16, #tpu.memory_space<vmem>>, vector<256x256xbf16>
    %cst = arith.constant dense<0.000000e+00> : vector<4x256xf32>
    %6 = tpu.matmul %3, %5, %cst {dimension_numbers = #tpu.dot_dimension_numbers<[1], [0], [0], [1], [0, 0, 1, 1], [], []>} : vector<4x256xbf16>, vector<256x256xbf16>, vector<4x256xf32> -> vector<4x256xf32>
    %c0_6 = arith.constant 0 : index
    %c0_7 = arith.constant 0 : index
    %7 = vector.load %arg6[%c0_6, %c0_7] : memref<4x1xf32, #tpu.memory_space<vmem>>, vector<4x1xf32>
    %8 = vector.broadcast %7 : vector<4x1xf32> to vector<4x256xf32>
    %9 = arith.addf %8, %6 : vector<4x256xf32>
    %10 = tpu.iota {dimensions = array<i32: 1>} : vector<4x256xi32>
    %c256_i32 = arith.constant 256 : i32
    %11 = arith.muli %arg0, %c256_i32 : i32
    %12 = vector.broadcast %11 : i32 to vector<4x256xi32>
    %13 = arith.addi %12, %10 : vector<4x256xi32>
    %c1_i32 = arith.constant 1 : i32
    %14 = vector.broadcast %c1_i32 : i32 to vector<4x256xi32>
    %15 = arith.addi %13, %14 : vector<4x256xi32>
    %16 = arith.sitofp %15 : vector<4x256xi32> to vector<4x256xf32>
    %c0_8 = arith.constant 0 : index
    %c0_9 = arith.constant 0 : index
    %17 = vector.load %arg1[%c0_8, %c0_9] : memref<4x1xf32, #tpu.memory_space<vmem>>, vector<4x1xf32>
    %18 = vector.broadcast %17 : vector<4x1xf32> to vector<4x256xf32>
    %19 = arith.subf %18, %9 : vector<4x256xf32>
    %20 = arith.subf %16, %9 : vector<4x256xf32>
    %21 = vector.broadcast %17 : vector<4x1xf32> to vector<4x256xf32>
    %22 = arith.addf %21, %20 : vector<4x256xf32>
    %23 = arith.divf %19, %22 : vector<4x256xf32>
    %cst_10 = arith.constant 1.000000e+00 : f32
    %24 = vector.broadcast %cst_10 : f32 to vector<4x256xf32>
    %25 = arith.subf %24, %23 : vector<4x256xf32>
    %c0_11 = arith.constant 0 : index
    %c0_12 = arith.constant 0 : index
    %26 = vector.load %arg5[%c0_11, %c0_12] : memref<4x1xf32, #tpu.memory_space<vmem>>, vector<4x1xf32>
    %27 = arith.mulf %4, %25 : vector<4x256xf32>
    %cst_13 = arith.constant dense<0.000000e+00> : vector<4xf32>
    %28 = vector.multi_reduction <add>, %27, %cst_13 [1] : vector<4x256xf32> to vector<4xf32>
    %29 = vector.shape_cast %28 : vector<4xf32> to vector<4x1xf32>
    %30 = arith.addf %26, %29 : vector<4x1xf32>
    %c0_14 = arith.constant 0 : index
    %c0_15 = arith.constant 0 : index
    %31 = vector.load %arg5[%c0_14, %c0_15] : memref<4x1xf32, #tpu.memory_space<vmem>>, vector<4x1xf32>
    tpu.vector_store %arg5[%c0_14, %c0_15], %30 {strides = array<i32>} : memref<4x1xf32, #tpu.memory_space<vmem>>, vector<4x1xf32>,
    %32 = vector.extract_strided_slice %9 {offsets = [0, 255], sizes = [4, 1], strides = [1, 1]} : vector<4x256xf32> to vector<4x1xf32>
    %c0_16 = arith.constant 0 : index
    %c0_17 = arith.constant 0 : index
    %33 = vector.load %arg6[%c0_16, %c0_17] : memref<4x1xf32, #tpu.memory_space<vmem>>, vector<4x1xf32>
    tpu.vector_store %arg6[%c0_16, %c0_17], %32 {strides = array<i32>} : memref<4x1xf32, #tpu.memory_space<vmem>>, vector<4x1xf32>,
    return
  }
  func.func @transform_0(%arg0: i32) -> (i32, i32) {
    %c0_i32 = arith.constant 0 : i32
    %c0_i32_0 = arith.constant 0 : i32
    %c0_i32_1 = arith.constant 0 : i32
    return %c0_i32, %c0_i32_0 : i32, i32
  }
  func.func @transform_1(%arg0: i32) -> (i32, i32) {
    %c0_i32 = arith.constant 0 : i32
    %c0_i32_0 = arith.constant 0 : i32
    %c0_i32_1 = arith.constant 0 : i32
    return %c0_i32, %c0_i32_0 : i32, i32
  }
  func.func @transform_2(%arg0: i32) -> (i32, i32) {
    %c0_i32 = arith.constant 0 : i32
    %c0_i32_0 = arith.constant 0 : i32
    return %c0_i32, %arg0 : i32, i32
  }
  func.func @transform_3(%arg0: i32) -> (i32, i32) {
    %c0_i32 = arith.constant 0 : i32
    %c0_i32_0 = arith.constant 0 : i32
    return %c0_i32, %arg0 : i32, i32
  }
  func.func @transform_4(%arg0: i32) -> (i32, i32) {
    %c0_i32 = arith.constant 0 : i32
    %c0_i32_0 = arith.constant 0 : i32
    %c0_i32_1 = arith.constant 0 : i32
    return %c0_i32, %c0_i32_0 : i32, i32
  }
}

</mosaic_0001>

<llo_original>
// kernel: eq.12
$region0: #{eq.12}
  %s0 = inlined_call_operand.vmem [shape: s32[2,16,16], index: 0, kind: input, shape index: {}]
  %s1 = inlined_call_operand.vmem [shape: s32[512], index: 1, kind: output, shape index: {}]
  $region1: #{eq.12} parent=0
    #allocation0 [shape = 'u8[4096]{0}', space=vmem, size = 0x1000, scoped, tag = 'scoped mem for output reshape']
    %v2 = vld [vmem:[%s0] ss:$8 sm:$0xf]
    %vm3 = vcmask 130048
    %4 = vst.msk [vmem:[#allocation0] sm:$0xf] %vm3, %v2
    %s5 = scalar_lea.vmem %s0, 7
    %v6 = vld [vmem:[%s5] ss:$8 sm:$0xf]
    %7 = vrot.lane.b32.xlu0 %v6, 112
    %v8 = vpop.permute.xlu0 %7
    %vm9 = vcmask 1048448
    %10 = vst.msk [vmem:[#allocation0] sm:$0xf] %vm9, %v8
    %s11 = scalar_lea.vmem %s0, 6
    %v12 = vld [vmem:[%s11] ss:$8 sm:$0xf]
    %13 = vrot.lane.b32.xlu0 %v12, 96
    %v14 = vpop.permute.xlu0 %13
    %vm15 = vcmask 917248
    %16 = vst.msk [vmem:[#allocation0] sm:$0xf] %vm15, %v14
    %s17 = scalar_lea.vmem %s0, 5
    %v18 = vld [vmem:[%s17] ss:$8 sm:$0xf]
    %19 = vrot.lane.b32.xlu0 %v18, 80
    %v20 = vpop.permute.xlu0 %19
    %vm21 = vcmask 786048
    %22 = vst.msk [vmem:[#allocation0] sm:$0xf] %vm21, %v20
    %s23 = scalar_lea.vmem %s0, 4
    %v24 = vld [vmem:[%s23] ss:$8 sm:$0xf]
    %25 = vrot.lane.b32.xlu0 %v24, 64
    %v26 = vpop.permute.xlu0 %25
    %vm27 = vcmask 654848
    %28 = vst.msk [vmem:[#allocation0] sm:$0xf] %vm27, %v26
    %s29 = scalar_lea.vmem %s0, 3
    %v30 = vld [vmem:[%s29] ss:$8 sm:$0xf]
    %31 = vrot.lane.b32.xlu0 %v30, 48
    %v32 = vpop.permute.xlu0 %31
    %vm33 = vcmask 523648
    %34 = vst.msk [vmem:[#allocation0] sm:$0xf] %vm33, %v32
    %s35 = scalar_lea.vmem %s0, 2
    %v36 = vld [vmem:[%s35] ss:$8 sm:$0xf]
    %37 = vrot.lane.b32.xlu0 %v36, 32
    %v38 = vpop.permute.xlu0 %37
    %vm39 = vcmask 392448
    %40 = vst.msk [vmem:[#allocation0] sm:$0xf] %vm39, %v38
    %s41 = scalar_lea.vmem %s0, 1
    %v42 = vld [vmem:[%s41] ss:$8 sm:$0xf]
    %43 = vrot.lane.b32.xlu0 %v42, 16
    %v44 = vpop.permute.xlu0 %43
    %vm45 = vcmask 261248
    %46 = vst.msk [vmem:[#allocation0] sm:$0xf] %vm45, %v44
    %s48 = sshll.u32 1, 4
    %s49 = ssub.s32 %s48, 1
    %v51 = vld [vmem:[#allocation0] sm:%s49]
    %s52 = sshll.u32 1, 4
    %s53 = ssub.s32 %s52, 1
    %54 = vst [vmem:[%s1] sm:%s53] %v51

// kernel: neg.3
$region0: #{neg.3}
  #allocation0 [shape = 's32[1]{0}', space=sflag, size = 0x4, scoped, tag = 'scoped memory for neg.3']
  %s0 = inlined_call_operand.vmem [shape: f32[4,512], index: 0, kind: input, shape index: {}]
  %s1 = inlined_call_operand.vmem [shape: f32[4,512], index: 1, kind: output, shape index: {}]
  %v2 = vld [vmem:[%s0] sm:$0xf]
  %3 = xla_tuple %v2
  %4 = xla_tuple %3
  %v5 = vxor.u32 %v2, 2147483648
  %6 = xla_tuple %v5
  %7 = vst [vmem:[%s1] sm:$0xf] %v5
  %s8 = scalar_lea.vmem %s0, 4
  %v9 = vld [vmem:[%s8] sm:$0xf]
  %10 = xla_tuple %v9
  %11 = xla_tuple %10
  %v12 = vxor.u32 %v9, 2147483648
  %13 = xla_tuple %v12
  %s14 = scalar_lea.vmem %s1, 4
  %15 = vst [vmem:[%s14] sm:$0xf] %v12
  %s16 = scalar_lea.vmem %s0, 8
  %v17 = vld [vmem:[%s16] sm:$0xf]
  %18 = xla_tuple %v17
  %19 = xla_tuple %18
  %v20 = vxor.u32 %v17, 2147483648
  %21 = xla_tuple %v20
  %s22 = scalar_lea.vmem %s1, 8
  %23 = vst [vmem:[%s22] sm:$0xf] %v20
  %s24 = scalar_lea.vmem %s0, 12
  %v25 = vld [vmem:[%s24] sm:$0xf]
  %26 = xla_tuple %v25
  %27 = xla_tuple %26
  %v28 = vxor.u32 %v25, 2147483648
  %29 = xla_tuple %v28
  %s30 = scalar_lea.vmem %s1, 12
  %31 = vst [vmem:[%s30] sm:$0xf] %v28

// kernel: lovasz_softmax.1
$region0: #{lovasz_softmax.1}
  #allocation0 [shape = 'u32[]', space=smem, size = 0x4, offset = 0x4, fixed_abs, tag = 'smem constant byte address 0x4 - core index']
  #allocation1 [shape = 'u32[144,128]{1,0:T(1,128)}', space=vmem, size = 0x12000, scoped, tag = 'internal scratch']
  #allocation2 [shape = 'f32[4,1]{1,0:T(4,128)}', space=vmem, size = 0x800, scoped, tag = 'scratch operand']
  %s0 = inlined_call_operand.vmem [shape: f32[4,1], index: 0, kind: input, shape index: {}]
  %s1 = inlined_call_operand.vmem [shape: bf16[256,256], index: 1, kind: input, shape index: {}]
  %s2 = inlined_call_operand.vmem [shape: f32[4,512], index: 2, kind: input, shape index: {}]
  %s3 = inlined_call_operand.vmem [shape: bf16[4,512], index: 3, kind: input, shape index: {}]
  %s4 = inlined_call_operand.vmem [shape: f32[4,1], index: 4, kind: output, shape index: {}]
  %s5 = sld [smem:[#allocation0]]
  $region53: #{lovasz_softmax.1} parent=0
    _
  %s7 = ssub.s32 1, %s5
  %s8 = scalar_select 0, %s7, %s5
  loop: start=0, step=1, limit=4
  $region2: #{lovasz_softmax.1} parent=0 // loop_pre_header
    _
  $region3: #{lovasz_softmax.1} parent=0 // loop_header
    %s10 = sphi 0, %s14
    %p11 = scmp.ge.s32.totalorder %s10, 4
    %s18 = sphi 0, %s18
    %s20 = sphi 0, %s18
    %s21 = sphi 0, %s20
    %s35 = sphi 0, %s21
    %s39 = sphi 0, %s39
    %s41 = sphi 0, %s39
    %s42 = sphi 0, %s41
    %s56 = sphi 0, %s42
    %s62 = sphi 0, %s64
    %s65 = sphi 0, %s62
    %s66 = sphi 0, %s65
    %s82 = sphi 0, %s66
    %s88 = sphi 0, %s90
    %s91 = sphi 0, %s88
    %s92 = sphi 0, %s91
    %s108 = sphi 0, %s92
    %s112 = sphi 0, %s112
    %s114 = sphi 0, %s112
    %s115 = sphi 0, %s114
    %s129 = sphi 0, %s115
  $region4: #{lovasz_softmax.1} parent=0 // loop_header_branch
    %13 = sbr.rel (%p11) target = $region8
  $region5: #{lovasz_softmax.1} parent=0 // loop_body
    %s15 = ssub.s32 %s10, 1
    %s16 = ssub.s32 %s10, 2
    %s17 = sadd.s32 %s10, 1
    %s19 = sadd.s32 %s18, 1
    %p22 = scmp.eq.s32.totalorder %s10, 1
    %p23 = scmp.ne.s32.totalorder %s18, %s20
    %p24 = scmp.eq.s32.totalorder %s10, 0
    %p25 = por %p23, %p24
    %p26 = scmp.ne.s32.totalorder %s18, %s20
    %p27 = scmp.eq.s32.totalorder %s15, 1
    %p28 = por %p26, %p27
    %p29 = scmp.ne.s32.totalorder %s20, %s21
    %p30 = scmp.eq.s32.totalorder %s15, 0
    %p31 = por %p29, %p30
    %p32 = scmp.ne.s32.totalorder %s20, %s21
    %p33 = scmp.eq.s32.totalorder %s16, 1
    %p34 = por %p32, %p33
    %p36 = scmp.ne.s32.totalorder %s21, %s35
    %p37 = scmp.eq.s32.totalorder %s16, 0
    %p38 = por %p36, %p37
    %s40 = sadd.s32 %s39, 1
    %p43 = scmp.eq.s32.totalorder %s10, 1
    %p44 = scmp.ne.s32.totalorder %s39, %s41
    %p45 = scmp.eq.s32.totalorder %s10, 0
    %p46 = por %p44, %p45
    %p47 = scmp.ne.s32.totalorder %s39, %s41
    %p48 = scmp.eq.s32.totalorder %s15, 1
    %p49 = por %p47, %p48
    %p50 = scmp.ne.s32.totalorder %s41, %s42
    %p51 = scmp.eq.s32.totalorder %s15, 0
    %p52 = por %p50, %p51
    %p53 = scmp.ne.s32.totalorder %s41, %s42
    %p54 = scmp.eq.s32.totalorder %s16, 1
    %p55 = por %p53, %p54
    %p57 = scmp.ne.s32.totalorder %s42, %s56
    %p58 = scmp.eq.s32.totalorder %s16, 0
    %p59 = por %p57, %p58
    %s60 = ssub.s32 %s10, %s17
    %p61 = scmp.eq.s32.totalorder %s60, 0
    %s63 = sadd.s32 %s62, 1
    %s64 = scalar_select %p61, %s62, %s63
    %p67 = pneg %p61
    %p68 = scmp.eq.s32.totalorder %s10, 1
    %p69 = por %p67, %p68
    %p70 = scmp.ne.s32.totalorder %s62, %s65
    %p71 = scmp.eq.s32.totalorder %s10, 0
    %p72 = por %p70, %p71
    %p73 = scmp.ne.s32.totalorder %s62, %s65
    %p74 = scmp.eq.s32.totalorder %s15, 1
    %p75 = por %p73, %p74
    %p76 = scmp.ne.s32.totalorder %s65, %s66
    %p77 = scmp.eq.s32.totalorder %s15, 0
    %p78 = por %p76, %p77
    %p79 = scmp.ne.s32.totalorder %s65, %s66
    %p80 = scmp.eq.s32.totalorder %s16, 1
    %p81 = por %p79, %p80
    %p83 = scmp.ne.s32.totalorder %s66, %s82
    %p84 = scmp.eq.s32.totalorder %s16, 0
    %p85 = por %p83, %p84
    %s86 = ssub.s32 %s10, %s17
    %p87 = scmp.eq.s32.totalorder %s86, 0
    %s89 = sadd.s32 %s88, 1
    %s90 = scalar_select %p87, %s88, %s89
    %p93 = pneg %p87
    %p94 = scmp.eq.s32.totalorder %s10, 1
    %p95 = por %p93, %p94
    %p96 = scmp.ne.s32.totalorder %s88, %s91
    %p97 = scmp.eq.s32.totalorder %s10, 0
    %p98 = por %p96, %p97
    %p99 = scmp.ne.s32.totalorder %s88, %s91
    %p100 = scmp.eq.s32.totalorder %s15, 1
    %p101 = por %p99, %p100
    %p102 = scmp.ne.s32.totalorder %s91, %s92
    %p103 = scmp.eq.s32.totalorder %s15, 0
    %p104 = por %p102, %p103
    %p105 = scmp.ne.s32.totalorder %s91, %s92
    %p106 = scmp.eq.s32.totalorder %s16, 1
    %p107 = por %p105, %p106
    %p109 = scmp.ne.s32.totalorder %s92, %s108
    %p110 = scmp.eq.s32.totalorder %s16, 0
    %p111 = por %p109, %p110
    %s113 = sadd.s32 %s112, 1
    %p116 = scmp.eq.s32.totalorder %s10, 1
    %p117 = scmp.ne.s32.totalorder %s112, %s114
    %p118 = scmp.eq.s32.totalorder %s10, 0
    %p119 = por %p117, %p118
    %p120 = scmp.ne.s32.totalorder %s112, %s114
    %p121 = scmp.eq.s32.totalorder %s15, 1
    %p122 = por %p120, %p121
    %p123 = scmp.ne.s32.totalorder %s114, %s115
    %p124 = scmp.eq.s32.totalorder %s15, 0
    %p125 = por %p123, %p124
    %p126 = scmp.ne.s32.totalorder %s114, %s115
    %p127 = scmp.eq.s32.totalorder %s16, 1
    %p128 = por %p126, %p127
    %p130 = scmp.ne.s32.totalorder %s115, %s129
    %p131 = scmp.eq.s32.totalorder %s16, 0
    %p132 = por %p130, %p131
    %p133 = scmp.le.s32.totalorder 1, %s10
    %p134 = scmp.lt.s32.totalorder %s10, 3
    %p135 = pnand %p133, %p134
    %p136 = pneg %p135
    // Predicated region
    $region9: #{lovasz_softmax.1} parent=5 // pred_check
      _
    $region10: #{lovasz_softmax.1} parent=5 // pred_check_branch
      %138 = sbr.rel (%p135) target = $region12
    $region11: #{lovasz_softmax.1} parent=5 // pred_region
      %s139 = ssub.s32 %s10, 1
      // Predicated region
      $region13: #{lovasz_softmax.1} parent=11 // pred_check
        %p140 = pneg %p31
      $region14: #{lovasz_softmax.1} parent=11 // pred_check_branch
        %142 = sbr.rel (%p140) target = $region16
      $region15: #{lovasz_softmax.1} parent=11 // pred_region
        _
      $region16: #{lovasz_softmax.1} parent=11 // pred_fallthru
        _
      // Predicated region
      $region17: #{lovasz_softmax.1} parent=11 // pred_check
        %p143 = pneg %p52
      $region18: #{lovasz_softmax.1} parent=11 // pred_check_branch
        %145 = sbr.rel (%p143) target = $region20
      $region19: #{lovasz_softmax.1} parent=11 // pred_region
        _
      $region20: #{lovasz_softmax.1} parent=11 // pred_fallthru
        _
    $region12: #{lovasz_softmax.1} parent=5 // pred_fallthru
      _
    %p146 = scmp.lt.s32.totalorder %s10, 2
    // Predicated region
    $region21: #{lovasz_softmax.1} parent=5 // pred_check
      %p147 = pneg %p146
    $region22: #{lovasz_softmax.1} parent=5 // pred_check_branch
      %149 = sbr.rel (%p147) target = $region24
    $region23: #{lovasz_softmax.1} parent=5 // pred_region
      // Predicated region
      $region25: #{lovasz_softmax.1} parent=23 // pred_check
        %p150 = pneg %p72
      $region26: #{lovasz_softmax.1} parent=23 // pred_check_branch
        %152 = sbr.rel (%p150) target = $region28
      $region27: #{lovasz_softmax.1} parent=23 // pred_region
        %s153 = smul.u32 2, %s10
        %p154 = scmp.lt.s32.totalorder %s153, 3
        %s155 = scalar_select %p154, %s153, 3
        %s156 = smul.addr %s155, 4
        %s157 = scalar_lea.vmem %s2, %s156
        %s158 = smul.u32 2, %s10
      $region28: #{lovasz_softmax.1} parent=23 // pred_fallthru
        _
      // Predicated region
      $region29: #{lovasz_softmax.1} parent=23 // pred_check
        %p159 = pneg %p98
      $region30: #{lovasz_softmax.1} parent=23 // pred_check_branch
        %161 = sbr.rel (%p159) target = $region32
      $region31: #{lovasz_softmax.1} parent=23 // pred_region
        %s162 = smul.u32 2, %s10
        %p163 = scmp.lt.s32.totalorder %s162, 3
        %s164 = scalar_select %p163, %s162, 3
        %s165 = smul.addr %s164, 2
        %s166 = scalar_lea.vmem %s3, %s165
        %s167 = smul.u32 2, %s10
      $region32: #{lovasz_softmax.1} parent=23 // pred_fallthru
        _
    $region24: #{lovasz_softmax.1} parent=5 // pred_fallthru
      _
    %p168 = scmp.le.s32.totalorder 1, %s10
    %p169 = scmp.lt.s32.totalorder %s10, 3
    %p170 = pnand %p168, %p169
    %p171 = pneg %p170
    // Predicated region
    $region33: #{lovasz_softmax.1} parent=5 // pred_check
      _
    $region34: #{lovasz_softmax.1} parent=5 // pred_check_branch
      %173 = sbr.rel (%p170) target = $region36
    $region35: #{lovasz_softmax.1} parent=5 // pred_region
      %s174 = ssub.s32 %s10, 1
      %p175 = pneg %p31
      %p176 = pneg %p28
      %p177 = pneg %p52
      %p178 = pneg %p49
      %s179 = smul.u32 2, %s15
      %p180 = scmp.lt.s32.totalorder %s179, 3
      %s181 = scalar_select %p180, %s179, 3
      %s182 = smul.addr %s181, 4
      %s183 = scalar_lea.vmem %s2, %s182
      %p184 = pneg %p78
      %p185 = pneg %p75
      %s186 = smul.u32 2, %s15
      %p187 = scmp.lt.s32.totalorder %s186, 3
      %s188 = scalar_select %p187, %s186, 3
      %s189 = smul.addr %s188, 2
      %s190 = scalar_lea.vmem %s3, %s189
      %p191 = pneg %p104
      %p192 = pneg %p101
      %p193 = pneg %p125
      %p194 = pneg %p122
      %s195 = smul.u32 2, %s15
      %p196 = scmp.lt.s32.totalorder %s195, 3
      %s197 = scalar_select %p196, %s195, 3
      %s198 = smul.addr %s197, 4
      %s199 = scalar_lea.vmem %s2, %s198
      %s200 = smul.u32 2, %s15
      %s201 = smul.u32 2, %s15
      %p202 = scmp.lt.s32.totalorder %s201, 3
      %s203 = scalar_select %p202, %s201, 3
      %s204 = smul.addr %s203, 2
      %s205 = scalar_lea.vmem %s3, %s204
      %s206 = smul.u32 2, %s15
      %p207 = scmp.eq.s32.totalorder %s15, 0
      // Predicated region
      $region37: #{lovasz_softmax.1} parent=35 // pred_check
        %p208 = pneg %p207
      $region38: #{lovasz_softmax.1} parent=35 // pred_check_branch
        %210 = sbr.rel (%p208) target = $region40
      $region39: #{lovasz_softmax.1} parent=35 // pred_region
        %vm211 = vcmask 3072
        %212 = vst.msk [vmem:[#allocation2] sm:$0xf] %vm211, 0.0
        %213 = vst.msk [vmem:[%s4] sm:$0xf] %vm211, 0.0
      $region40: #{lovasz_softmax.1} parent=35 // pred_fallthru
        _
      %v214 = vld [vmem:[%s205] sm:$0xf]
      %v215 = vld [vmem:[%s199] sm:$0xff]
      %v216 = vld [vmem:[%s1] sm:$0xff]
      %v217 = vld [vmem:[%s1 + $0x8] sm:$0xff]
      %v218 = vld [vmem:[%s1 + $0x10] sm:$0xff]
      %v219 = vld [vmem:[%s1 + $0x18] sm:$0xff]
      %v220 = vld [vmem:[%s1 + $0x20] sm:$0xff]
      %v221 = vld [vmem:[%s1 + $0x28] sm:$0xff]
      %v222 = vld [vmem:[%s1 + $0x30] sm:$0xff]
      %v223 = vld [vmem:[%s1 + $0x38] sm:$0xff]
      %v224 = vld [vmem:[%s1 + $0x40] sm:$0xff]
      %v225 = vld [vmem:[%s1 + $0x48] sm:$0xff]
      %v226 = vld [vmem:[%s1 + $0x50] sm:$0xff]
      %v227 = vld [vmem:[%s1 + $0x58] sm:$0xff]
      %v228 = vld [vmem:[%s1 + $0x60] sm:$0xff]
      %v229 = vld [vmem:[%s1 + $0x68] sm:$0xff]
      %v230 = vld [vmem:[%s1 + $0x70] sm:$0xff]
      %v231 = vld [vmem:[%s1 + $0x78] sm:$0xff]
      %v232 = vld [vmem:[%s1 + $0x80] sm:$0xff]
      %v233 = vld [vmem:[%s1 + $0x88] sm:$0xff]
      %v234 = vld [vmem:[%s1 + $0x90] sm:$0xff]
      %v235 = vld [vmem:[%s1 + $0x98] sm:$0xff]
      %v236 = vld [vmem:[%s1 + $0xa0] sm:$0xff]
      %v237 = vld [vmem:[%s1 + $0xa8] sm:$0xff]
      %v238 = vld [vmem:[%s1 + $0xb0] sm:$0xff]
      %v239 = vld [vmem:[%s1 + $0xb8] sm:$0xff]
      %v240 = vld [vmem:[%s1 + $0xc0] sm:$0xff]
      %v241 = vld [vmem:[%s1 + $0xc8] sm:$0xff]
      %v242 = vld [vmem:[%s1 + $0xd0] sm:$0xff]
      %v243 = vld [vmem:[%s1 + $0xd8] sm:$0xff]
      %v244 = vld [vmem:[%s1 + $0xe0] sm:$0xff]
      %v245 = vld [vmem:[%s1 + $0xe8] sm:$0xff]
      %v246 = vld [vmem:[%s1 + $0xf0] sm:$0xff]
      %v247 = vld [vmem:[%s1 + $0xf8] sm:$0xff]
      %v250 = vunpack.c.l.s4 1983009808
      %v251 = vunpack.c.0.s8 %v250
      %v252 = vlaneseq
      %v253 = vshrl.u32 %v252, 7
      %v254 = vsub.s32 %v251, %v253
      %v255 = vrot.slane %v214, %v254
      %v256 = vcombine.high %v255, %v255
      %v291 = vunpack.c.l.b16 %v216
      %v292 = vunpack.c.h.b16 %v216
      %v293 = vunpack.c.l.b16 %v217
      %v294 = vunpack.c.h.b16 %v217
      %v295 = vunpack.c.l.b16 %v218
      %v296 = vunpack.c.h.b16 %v218
      %v297 = vunpack.c.l.b16 %v219
      %v298 = vunpack.c.h.b16 %v219
      %v299 = vunpack.c.l.b16 %v220
      %v300 = vunpack.c.h.b16 %v220
      %v301 = vunpack.c.l.b16 %v221
      %v302 = vunpack.c.h.b16 %v221
      %v303 = vunpack.c.l.b16 %v222
      %v304 = vunpack.c.h.b16 %v222
      %v305 = vunpack.c.l.b16 %v223
      %v306 = vunpack.c.h.b16 %v223
      %v307 = vunpack.c.l.b16 %v224
      %v308 = vunpack.c.h.b16 %v224
      %v309 = vunpack.c.l.b16 %v225
      %v310 = vunpack.c.h.b16 %v225
      %v311 = vunpack.c.l.b16 %v226
      %v312 = vunpack.c.h.b16 %v226
      %v313 = vunpack.c.l.b16 %v227
      %v314 = vunpack.c.h.b16 %v227
      %v315 = vunpack.c.l.b16 %v228
      %v316 = vunpack.c.h.b16 %v228
      %v317 = vunpack.c.l.b16 %v229
      %v318 = vunpack.c.h.b16 %v229
      %v319 = vunpack.c.l.b16 %v230
      %v320 = vunpack.c.h.b16 %v230
      %v321 = vunpack.c.l.b16 %v231
      %v322 = vunpack.c.h.b16 %v231
      %v323 = vunpack.c.l.b16 %v232
      %v324 = vunpack.c.h.b16 %v232
      %v325 = vunpack.c.l.b16 %v233
      %v326 = vunpack.c.h.b16 %v233
      %v327 = vunpack.c.l.b16 %v234
      %v328 = vunpack.c.h.b16 %v234
      %v329 = vunpack.c.l.b16 %v235
      %v330 = vunpack.c.h.b16 %v235
      %v331 = vunpack.c.l.b16 %v236
      %v332 = vunpack.c.h.b16 %v236
      %v333 = vunpack.c.l.b16 %v237
      %v334 = vunpack.c.h.b16 %v237
      %v335 = vunpack.c.l.b16 %v238
      %v336 = vunpack.c.h.b16 %v238
      %v337 = vunpack.c.l.b16 %v239
      %v338 = vunpack.c.h.b16 %v239
      %v339 = vunpack.c.l.b16 %v240
      %v340 = vunpack.c.h.b16 %v240
      %v341 = vunpack.c.l.b16 %v241
      %v342 = vunpack.c.h.b16 %v241
      %v343 = vunpack.c.l.b16 %v242
      %v344 = vunpack.c.h.b16 %v242
      %v345 = vunpack.c.l.b16 %v243
      %v346 = vunpack.c.h.b16 %v243
      %v347 = vunpack.c.l.b16 %v244
      %v348 = vunpack.c.h.b16 %v244
      %v349 = vunpack.c.l.b16 %v245
      %v350 = vunpack.c.h.b16 %v245
      %v351 = vunpack.c.l.b16 %v246
      %v352 = vunpack.c.h.b16 %v246
      %v353 = vunpack.c.l.b16 %v247
      %v354 = vunpack.c.h.b16 %v247
      %v355 = vpack.c.b16 %v293, %v291
      %v356 = vpack.c.b16 %v294, %v292
      %v357 = vpack.c.b16 %v297, %v295
      %v358 = vpack.c.b16 %v298, %v296
      %v359 = vpack.c.b16 %v301, %v299
      %v360 = vpack.c.b16 %v302, %v300
      %v361 = vpack.c.b16 %v305, %v303
      %v362 = vpack.c.b16 %v306, %v304
      %v363 = vpack.c.b16 %v309, %v307
      %v364 = vpack.c.b16 %v310, %v308
      %v365 = vpack.c.b16 %v313, %v311
      %v366 = vpack.c.b16 %v314, %v312
      %v367 = vpack.c.b16 %v317, %v315
      %v368 = vpack.c.b16 %v318, %v316
      %v369 = vpack.c.b16 %v321, %v319
      %v370 = vpack.c.b16 %v322, %v320
      %v371 = vpack.c.b16 %v325, %v323
      %v372 = vpack.c.b16 %v326, %v324
      %v373 = vpack.c.b16 %v329, %v327
      %v374 = vpack.c.b16 %v330, %v328
      %v375 = vpack.c.b16 %v333, %v331
      %v376 = vpack.c.b16 %v334, %v332
      %v377 = vpack.c.b16 %v337, %v335
      %v378 = vpack.c.b16 %v338, %v336
      %v379 = vpack.c.b16 %v341, %v339
      %v380 = vpack.c.b16 %v342, %v340
      %v381 = vpack.c.b16 %v345, %v343
      %v382 = vpack.c.b16 %v346, %v344
      %v383 = vpack.c.b16 %v349, %v347
      %v384 = vpack.c.b16 %v350, %v348
      %v385 = vpack.c.b16 %v353, %v351
      %v386 = vpack.c.b16 %v354, %v352
      %419 = vmatprep.subr.bf16.mxu0 %v370
      %420 = vmatpush1.bf16.msra.mxu0 %v369
      %421 = vmatprep.subr.bf16.mxu0 %v368
      %422 = vmatpush1.bf16.msra.mxu0 %v367
      %423 = vmatprep.subr.bf16.mxu0 %v366
      %424 = vmatpush1.bf16.msra.mxu0 %v365
      %425 = vmatprep.subr.bf16.mxu0 %v364
      %426 = vmatpush1.bf16.msra.mxu0 %v363
      %427 = vmatprep.subr.bf16.mxu0 %v362
      %428 = vmatpush1.bf16.msra.mxu0 %v361
      %429 = vmatprep.subr.bf16.mxu0 %v360
      %430 = vmatpush1.bf16.msra.mxu0 %v359
      %431 = vmatprep.subr.bf16.mxu0 %v358
      %432 = vmatpush1.bf16.msra.mxu0 %v357
      %433 = vmatprep.subr.bf16.mxu0 %v356
      %434 = vmatpush1.bf16.msra.mxu0 %v355
      %435 = vmatprep.subr.bf16.mxu0 %v386
      %436 = vmatpush2.bf16.msra.mxu0 %v385
      %437 = vmatprep.subr.bf16.mxu0 %v384
      %438 = vmatpush2.bf16.msra.mxu0 %v383
      %439 = vmatprep.subr.bf16.mxu0 %v382
      %440 = vmatpush2.bf16.msra.mxu0 %v381
      %441 = vmatprep.subr.bf16.mxu0 %v380
      %442 = vmatpush2.bf16.msra.mxu0 %v379
      %443 = vmatprep.subr.bf16.mxu0 %v378
      %444 = vmatpush2.bf16.msra.mxu0 %v377
      %445 = vmatprep.subr.bf16.mxu0 %v376
      %446 = vmatpush2.bf16.msra.mxu0 %v375
      %447 = vmatprep.subr.bf16.mxu0 %v374
      %448 = vmatpush2.bf16.msra.mxu0 %v373
      %449 = vmatprep.subr.bf16.mxu0 %v372
      %450 = vmatpush2.bf16.msra.mxu0 %v371
      %451 = vmatprep.mubr.bf16.mxu0 %v256
      %452 = vmatmul.mubr.bf16.gmra.mxu0 %v255
      %v453 = vpop.f32.mrf.mxu0
      %v454 = vadd.f32 0.0, %v453
      %v455 = vpop.f32.mrf.mxu0
      %v456 = vadd.f32 0.0, %v455
      %v457 = vpop.f32.mrf.mxu0
      %v458 = vpop.f32.mrf.mxu0
      %459 = vdwg.mxu0
      %v460 = vld [vmem:[#allocation2] sm:$0xf]
      %462 = vset.pattern.permute.xlu0 0
      %463 = vperm.xlu0 %462, %v460
      %v464 = vpop.permute.xlu0 %463
      %v466 = vadd.f32 %v464, %v454
      %v467 = vadd.f32 %v464, %v456
      %v468 = vlaneseq
      %v469 = vand.u32 %v468, 127
      %v470 = vadd.s32 %v469, 128
      %s471 = smul.u32 %s15, 256
      %v472 = vstv %s471
      %v473 = vadd.s32 %v472, %v469
      %v474 = vadd.s32 %v472, %v470
      %v475 = vadd.s32 %v473, 1
      %v476 = vadd.s32 %v474, 1
      %v477 = vcvt.s32.f32 %v475
      %v478 = vcvt.s32.f32 %v476
      %v479 = vld [vmem:[%s0] sm:$0xf]
      %481 = vset.pattern.permute.xlu0 0
      %482 = vperm.xlu0 %481, %v479
      %v483 = vpop.permute.xlu0 %482
      %v485 = vsub.f32 %v483, %v466
      %v486 = vsub.f32 %v483, %v467
      %v487 = vsub.f32 %v477, %v466
      %v488 = vsub.f32 %v478, %v467
      %v489 = vadd.f32 %v483, %v487
      %v490 = vadd.f32 %v483, %v488
      %v491 = vrcp.pop %v489
      %v492 = vmul.f32 %v485, %v491
      %v493 = vrcp.pop %v490
      %v494 = vmul.f32 %v486, %v493
      %v495 = vsub.f32 1.0, %v492
      %v496 = vsub.f32 1.0, %v494
      %v497 = vld [vmem:[%s4] sm:$0xf]
      %v500 = vcombine.low %v495, %v496
      %v502 = vmul.f32 %v215, %v500
      %v504 = vcombine.high %v502, %v502
      %vm506 = vcmask 1043456
      %v507 = vsel %vm506, %v502, 0.0
      %v508 = vsel %vm506, %v504, 0.0
      %v509 = vadd.f32 %v507, %v508
      %510 = vadd.xlane.f32.xlu0 %v509
      %v511 = vpop.xlane.xlu0 %510
      %v512 = vadd.f32 %v497, %v511
      %vm513 = vcmask 3072
      %514 = vst.msk [vmem:[%s4] sm:$0xf] %vm513, %v512
      %516 = vrot.lane.b32.xlu0 %v467, 1
      %v517 = vpop.permute.xlu0 %516
      %519 = vst.msk [vmem:[#allocation2] sm:$0xf] %vm513, %v517
      // Predicated region
      $region41: #{lovasz_softmax.1} parent=35 // pred_check
        %p520 = pneg %p122
      $region42: #{lovasz_softmax.1} parent=35 // pred_check_branch
        %522 = sbr.rel (%p520) target = $region44
      $region43: #{lovasz_softmax.1} parent=35 // pred_region
        _
      $region44: #{lovasz_softmax.1} parent=35 // pred_fallthru
        _
      // Predicated region
      $region45: #{lovasz_softmax.1} parent=35 // pred_check
        %p523 = pneg %p122
      $region46: #{lovasz_softmax.1} parent=35 // pred_check_branch
        %525 = sbr.rel (%p523) target = $region48
      $region47: #{lovasz_softmax.1} parent=35 // pred_region
        _
      $region48: #{lovasz_softmax.1} parent=35 // pred_fallthru
        _
    $region36: #{lovasz_softmax.1} parent=5 // pred_fallthru
      _
    %p526 = scmp.le.s32.totalorder 2, %s10
    // Predicated region
    $region49: #{lovasz_softmax.1} parent=5 // pred_check
      %p527 = pneg %p526
    $region50: #{lovasz_softmax.1} parent=5 // pred_check_branch
      %529 = sbr.rel (%p527) target = $region52
    $region51: #{lovasz_softmax.1} parent=5 // pred_region
      %s530 = ssub.s32 %s10, 2
    $region52: #{lovasz_softmax.1} parent=5 // pred_fallthru
      _
  $region6: #{lovasz_softmax.1} parent=0 // loop_footer
    %s14 = sadd.s32 1, %s10
  $region7: #{lovasz_softmax.1} parent=0 // loop_footer_branch
    %9 = sbr.rel target = $region3
  $region8: #{lovasz_softmax.1} parent=0 // loop_exit
    _

</llo_original>
